<compile_context>
chip_gen: v5e
topology: v5e:2x2
jax: 0.10.0
libtpu: 0.0.40
codegen_flags: <defaults>
</compile_context>

<pallas_src>
import math
import functools

import jax
import jax.numpy as jnp
from jax.experimental import pallas as pl
from jax.experimental.pallas import tpu as pltpu


_EPS = 1e-6        # spec: nn.LayerNorm(hidden, eps=1e-06)
_NEG_INF = -1e18   # spec: masked_fill_(mask, -1e18)


def _detect_cfg():
    """Generation-specific tile targets / VMEM budget.
    v7x: 64 MiB VMEM per TC -> leave headroom, smaller lane tiles.
    v5e/v6e: 128 MiB -> bigger blocks, deeper pipelining."""
    vmem = None
    try:
        vmem = getattr(pltpu.get_tpu_info(), "vmem_capacity_bytes", None)
    except Exception:
        vmem = None
    if vmem is not None and vmem <= 96 * 2**20:
        return dict(vmem_limit=48 * 2**20, tm=256, tn=256, tk=256, tq=256, tkv=256)
    if vmem is None:  # unknown generation -> conservative, safe everywhere
        return dict(vmem_limit=64 * 2**20, tm=256, tn=256, tk=256, tq=256, tkv=256)
    return dict(vmem_limit=100 * 2**20, tm=256, tn=512, tk=512, tq=256, tkv=512)


_CFG = _detect_cfg()


def _cp(dims):
    return pltpu.CompilerParams(dimension_semantics=dims,
                                vmem_limit_bytes=_CFG["vmem_limit"])


def _pick_tile(dim, target, align):
    """Largest tile <= target that is a multiple of `align` and divides `dim`;
    falls back to the full dimension (always a legal block shape)."""
    if dim <= target:
        return dim
    t = (target // align) * align
    while t >= align:
        if dim % t == 0:
            return t
        t -= align
    return dim


def _ln(x, g_ref, b_ref):
    """LayerNorm in f32 over the last axis (full hidden dim per block)."""
    xf = x.astype(jnp.float32)
    mean = jnp.mean(xf, axis=-1, keepdims=True)
    xc = xf - mean
    var = jnp.mean(xc * xc, axis=-1, keepdims=True)
    y = xc * jax.lax.rsqrt(var + _EPS)
    return y * g_ref[...].astype(jnp.float32) + b_ref[...].astype(jnp.float32)


# ----------- Fused LayerNorm + projection, weight tiled over columns ----------

def _ln_proj_kernel(x_ref, g_ref, b_ref, w_ref, *refs, num_out):
    o_refs = refs[:num_out]
    y_sc = refs[num_out]

    @pl.when(pl.program_id(1) == 0)      # LN computed once per row-block
    def _():
        y_sc[...] = _ln(x_ref[...], g_ref, b_ref).astype(y_sc.dtype)

    y = y_sc[...]
    for o in range(num_out):
        z = jnp.dot(y, w_ref[o], preferred_element_type=jnp.float32)
        o_refs[o][...] = z.astype(o_refs[o].dtype)


def ln_proj(x2, gamma, beta, w, num_out):
    """outputs[o] = LayerNorm(x2) @ w[o]   with w stacked (num_out, H, H) bf16.
    Output-column axis is tiled on the grid so only (num_out, H, tn) of weight
    is VMEM-resident per step."""
    M, H = x2.shape
    tm = _pick_tile(M, _CFG["tm"], 16)
    tn = _pick_tile(H, _CFG["tn"], 128)
    kern = functools.partial(_ln_proj_kernel, num_out=num_out)
    return pl.pallas_call(
        kern,
        out_shape=tuple(jax.ShapeDtypeStruct((M, H), jnp.bfloat16)
                        for _ in range(num_out)),
        grid=(M // tm, H // tn),
        in_specs=[pl.BlockSpec((tm, H), lambda i, j: (i, 0)),
                  pl.BlockSpec((1, H), lambda i, j: (0, 0)),
                  pl.BlockSpec((1, H), lambda i, j: (0, 0)),
                  pl.BlockSpec((num_out, H, tn), lambda i, j: (0, 0, j))],
        out_specs=tuple(pl.BlockSpec((tm, tn), lambda i, j: (i, j))
                        for _ in range(num_out)),
        scratch_shapes=[pltpu.VMEM((tm, H), jnp.bfloat16)],
        compiler_params=_cp(("parallel", "arbitrary")),
    )(x2, gamma.reshape(1, H), beta.reshape(1, H), w)


def _proj_kernel(x_ref, w_ref, *o_refs):
    x = x_ref[...].astype(jnp.bfloat16)
    for o in range(len(o_refs)):
        z = jnp.dot(x, w_ref[o], preferred_element_type=jnp.float32)
        o_refs[o][...] = z.astype(o_refs[o].dtype)


def proj(x2, w, num_out):
    """outputs[o] = x2 @ w[o]   (no LayerNorm), weight columns tiled on grid."""
    M, H = x2.shape
    tm = _pick_tile(M, _CFG["tm"], 16)
    tn = _pick_tile(H, _CFG["tn"], 128)
    return pl.pallas_call(
        _proj_kernel,
        out_shape=tuple(jax.ShapeDtypeStruct((M, H), jnp.bfloat16)
                        for _ in range(num_out)),
        grid=(M // tm, H // tn),
        in_specs=[pl.BlockSpec((tm, H), lambda i, j: (i, 0)),
                  pl.BlockSpec((num_out, H, tn), lambda i, j: (0, 0, j))],
        out_specs=tuple(pl.BlockSpec((tm, tn), lambda i, j: (i, j))
                        for _ in range(num_out)),
        compiler_params=_cp(("parallel", "arbitrary")),
    )(x2, w)


# -------- Tiled matmul (K-accumulated) + bias + residual (output proj) --------

def _matmul_bias_res_kernel(x_ref, w_ref, b_ref, r_ref, o_ref, acc_ref):
    @pl.when(pl.program_id(2) == 0)
    def _():
        acc_ref[...] = jnp.zeros(acc_ref.shape, acc_ref.dtype)

    acc_ref[...] += jnp.dot(x_ref[...].astype(jnp.bfloat16), w_ref[...],
                            preferred_element_type=jnp.float32)

    @pl.when(pl.program_id(2) == pl.num_programs(2) - 1)
    def _():
        o_ref[...] = (acc_ref[...] + b_ref[...].astype(jnp.float32)
                      + r_ref[...].astype(jnp.float32)).astype(o_ref.dtype)


def matmul_bias_res(x2, w, bias, res2):
    """out = x2 @ w + bias + res2  (f32 accumulation, residual fused, bf16 out)."""
    M, K = x2.shape
    N = w.shape[1]
    tm = _pick_tile(M, _CFG["tm"], 16)
    tn = _pick_tile(N, _CFG["tn"], 128)
    tk = _pick_tile(K, _CFG["tk"], 128)
    return pl.pallas_call(
        _matmul_bias_res_kernel,
        out_shape=jax.ShapeDtypeStruct((M, N), jnp.bfloat16),
        grid=(M // tm, N // tn, K // tk),
        in_specs=[pl.BlockSpec((tm, tk), lambda i, j, k: (i, k)),
                  pl.BlockSpec((tk, tn), lambda i, j, k: (k, j)),
                  pl.BlockSpec((1, tn), lambda i, j, k: (0, j)),
                  pl.BlockSpec((tm, tn), lambda i, j, k: (i, j))],
        out_specs=pl.BlockSpec((tm, tn), lambda i, j, k: (i, j)),
        scratch_shapes=[pltpu.VMEM((tm, tn), jnp.float32)],
        compiler_params=_cp(("parallel", "parallel", "arbitrary")),
    )(x2, w, bias.reshape(1, N), res2)


# ---- Fused LayerNorm + FeedForward (F-tiled) + residual (+ final LayerNorm) --

def _ln_ff_res_kernel(x_ref, g_ref, b_ref, w1_ref, w2_ref, *refs, fuse_final):
    if fuse_final:
        fg_ref, fb_ref = refs[0], refs[1]
        refs = refs[2:]
    o_ref, y_sc, acc_sc = refs
    f = pl.program_id(1)

    @pl.when(f == 0)
    def _():
        y_sc[...] = _ln(x_ref[...], g_ref, b_ref).astype(y_sc.dtype)
        acc_sc[...] = jnp.zeros(acc_sc.shape, acc_sc.dtype)

    h = jnp.dot(y_sc[...], w1_ref[...], preferred_element_type=jnp.float32)
    h = jnp.maximum(h, 0.0).astype(jnp.bfloat16)          # ReLU
    acc_sc[...] += jnp.dot(h, w2_ref[...], preferred_element_type=jnp.float32)

    @pl.when(f == pl.num_programs(1) - 1)
    def _():
        out = x_ref[...].astype(jnp.float32) + acc_sc[...]   # residual fused
        if fuse_final:
            out = _ln(out, fg_ref, fb_ref)                    # decoder final LN
        o_ref[...] = out.astype(o_ref.dtype)


def ln_ff_res(x2, gamma, beta, w1, w2, final_gb=None, out_dtype=jnp.bfloat16):
    M, H = x2.shape
    F = w1.shape[1]
    tm = _pick_tile(M, _CFG["tm"], 16)
    tf = _pick_tile(F, _CFG["tk"], 128)
    fuse_final = final_gb is not None
    in_specs = [pl.BlockSpec((tm, H), lambda i, f: (i, 0)),
                pl.BlockSpec((1, H), lambda i, f: (0, 0)),
                pl.BlockSpec((1, H), lambda i, f: (0, 0)),
                pl.BlockSpec((H, tf), lambda i, f: (0, f)),
                pl.BlockSpec((tf, H), lambda i, f: (f, 0))]
    args = [x2, gamma.reshape(1, H), beta.reshape(1, H), w1, w2]
    if fuse_final:
        fg, fb = final_gb
        in_specs += [pl.BlockSpec((1, H), lambda i, f: (0, 0)),
                     pl.BlockSpec((1, H), lambda i, f: (0, 0))]
        args += [fg.reshape(1, H), fb.reshape(1, H)]
    kern = functools.partial(_ln_ff_res_kernel, fuse_final=fuse_final)
    return pl.pallas_call(
        kern,
        out_shape=jax.ShapeDtypeStruct((M, H), out_dtype),
        grid=(M // tm, F // tf),
        in_specs=in_specs,
        out_specs=pl.BlockSpec((tm, H), lambda i, f: (i, 0)),
        scratch_shapes=[pltpu.VMEM((tm, H), jnp.bfloat16),
                        pltpu.VMEM((tm, H), jnp.float32)],
        compiler_params=_cp(("parallel", "arbitrary")),
    )(*args)


# --------------------- Flash-style multi-head attention -----------------------

def _attn_kernel(pad_ref, q_ref, k_ref, v_ref, o_ref, m_sc, l_sc, acc_sc, *,
                 num_heads, causal):
    ki = pl.program_id(2)

    @pl.when(ki == 0)
    def _():
        m_sc[...] = jnp.full(m_sc.shape, -jnp.inf, m_sc.dtype)
        l_sc[...] = jnp.zeros(l_sc.shape, l_sc.dtype)
        acc_sc[...] = jnp.zeros(acc_sc.shape, acc_sc.dtype)

    tq, H = q_ref.shape[1], q_ref.shape[2]
    tk = k_ref.shape[1]
    dh = H // num_heads

    q = q_ref[0]          # (tq, H) bf16; 1/sqrt(dim_per_head) folded into Wq
    k = k_ref[0]          # (tk, H) bf16
    v = v_ref[0]          # (tk, H) bf16

    # key-padding (+ optionally causal) mask, built in-kernel.
    masked = jnp.broadcast_to(pad_ref[0] != 0.0, (tq, tk))
    if causal:
        row = pl.program_id(1) * tq + jax.lax.broadcasted_iota(jnp.int32, (tq, tk), 0)
        col = ki * tk + jax.lax.broadcasted_iota(jnp.int32, (tq, tk), 1)
        masked = jnp.logical_or(masked, col > row)

    # TODO(synk): for best v6e/v7x MXU utilization dim_per_head should be >=128;
    # small dh (toy sizes) underfeeds the 256x256 MXU on the QK^T matmul.
    dims = (((1,), (1,)), ((), ()))   # contract last dim of both operands
    for h in range(num_heads):        # static unroll: 2-D MXU matmuls per head
        sl = slice(h * dh, (h + 1) * dh)
        s = jax.lax.dot_general(q[:, sl], k[:, sl], dims,
                                preferred_element_type=jnp.float32)   # (tq, tk)
        s = jnp.where(masked, _NEG_INF, s)
        m_prev = m_sc[h]                                              # (tq, 1)
        m_new = jnp.maximum(m_prev, jnp.max(s, axis=-1, keepdims=True))
        alpha = jnp.exp(m_prev - m_new)
        p = jnp.exp(s - m_new)
        l_sc[h] = alpha * l_sc[h] + jnp.sum(p, axis=-1, keepdims=True)
        acc_sc[:, sl] = alpha * acc_sc[:, sl] + jnp.dot(
            p.astype(v.dtype), v[:, sl], preferred_element_type=jnp.float32)
        m_sc[h] = m_new

    @pl.when(ki == pl.num_programs(2) - 1)
    def _():
        # normalize in-place per head, then one lane-dense store (no concatenate)
        for h in range(num_heads):
            sl = slice(h * dh, (h + 1) * dh)
            acc_sc[:, sl] = acc_sc[:, sl] * pl.reciprocal(l_sc[h], approx=True)
        o_ref[0] = acc_sc[...].astype(o_ref.dtype)


def attention(q, k, v, key_pad, num_heads, causal):
    """q: (B, Lq, H), k/v: (B, Lk, H), key_pad: (B, 1, Lk) f32 (nonzero=masked)."""
    B, Lq, H = q.shape
    Lk = k.shape[1]
    tq = _pick_tile(Lq, _CFG["tq"], 16)
    tk = _pick_tile(Lk, _CFG["tkv"], 128)
    kern = functools.partial(_attn_kernel, num_heads=num_heads, causal=causal)
    return pl.pallas_call(
        kern,
        out_shape=jax.ShapeDtypeStruct((B, Lq, H), jnp.bfloat16),
        grid=(B, Lq // tq, Lk // tk),
        in_specs=[pl.BlockSpec((1, 1, tk), lambda b, qi, ki: (b, 0, ki)),
                  pl.BlockSpec((1, tq, H), lambda b, qi, ki: (b, qi, 0)),
                  pl.BlockSpec((1, tk, H), lambda b, qi, ki: (b, ki, 0)),
                  pl.BlockSpec((1, tk, H), lambda b, qi, ki: (b, ki, 0))],
        out_specs=pl.BlockSpec((1, tq, H), lambda b, qi, ki: (b, qi, 0)),
        scratch_shapes=[pltpu.VMEM((num_heads, tq, 1), jnp.float32),
                        pltpu.VMEM((num_heads, tq, 1), jnp.float32),
                        pltpu.VMEM((tq, H), jnp.float32)],
        compiler_params=_cp(("parallel", "parallel", "arbitrary")),
    )(key_pad, q, k, v)


# ------------------------------ Decoder modules -------------------------------

def decoder_layer(x, enc_out, src_pad, tgt_pad, params, head_count,
                  previous=None, final_gb=None):
    """One pre-LN decoder block. src_pad/tgt_pad: (B, L_key), nonzero == masked.
    Causal masking is generated inside the attention kernel when previous is
    None (the Decoder switches to a zero mask when previous is given)."""
    B, Lq, H = x.shape
    x2 = x.reshape(B * Lq, H)
    g0, b0 = params['ln0_g'], params['ln0_b']

    # --- self attention ---
    if previous is None:
        all_input = x
        (q2,) = ln_proj(x2, g0, b0, params['w_q_self'], num_out=1)
        k2, v2 = ln_proj(x2, g0, b0, params['w_kv_self'], num_out=2)
        Lk = Lq
        key_pad = tgt_pad.astype(jnp.float32).reshape(B, 1, Lk)
        causal = True
    else:
        all_input = jnp.concatenate([previous, x], axis=1)
        Lk = all_input.shape[1]
        a2 = all_input.reshape(B * Lk, H)
        (q2,) = ln_proj(x2, g0, b0, params['w_q_self'], num_out=1)
        k2, v2 = ln_proj(a2, g0, b0, params['w_kv_self'], num_out=2)
        key_pad = jnp.zeros((B, 1, Lk), jnp.float32)   # Decoder uses zero_mask
        causal = False

    ctx = attention(q2.reshape(B, Lq, H), k2.reshape(B, Lk, H),
                    v2.reshape(B, Lk, H), key_pad, head_count, causal)
    x2 = matmul_bias_res(ctx.reshape(B * Lq, H), params['w_o_self'],
                         params['b_o_self'], x2)

    # --- cross attention ---
    Ls = enc_out.shape[1]
    (q2,) = ln_proj(x2, params['ln1_g'], params['ln1_b'],
                    params['w_q_src'], num_out=1)
    k2, v2 = proj(enc_out.reshape(B * Ls, H), params['w_kv_src'], num_out=2)
    ctx = attention(q2.reshape(B, Lq, H), k2.reshape(B, Ls, H),
                    v2.reshape(B, Ls, H),
                    src_pad.astype(jnp.float32).reshape(B, 1, Ls),
                    head_count, causal=False)
    x2 = matmul_bias_res(ctx.reshape(B * Lq, H), params['w_o_src'],
                         params['b_o_src'], x2)

    # --- feed forward (+ fused decoder-final LayerNorm on the last layer) ---
    out_dtype = jnp.float32 if final_gb is not None else jnp.bfloat16
    x2 = ln_ff_res(x2, params['ln2_g'], params['ln2_b'],
                   params['ff_w1'], params['ff_w2'],
                   final_gb=final_gb, out_dtype=out_dtype)

    return x2.reshape(B, Lq, H), all_input


def decoder(x_emb, enc_out, src_pad, tgt_pad, params, num_heads, previous=None):
    """Decoder.forward on already-embedded target activations.
    # TODO(synk): the `embedding(tgt, timestep)` submodule is external to this
    # spec and is not implemented; pass its output as `x_emb`.
    """
    x = x_emb.astype(jnp.bfloat16)              # residual stream carried in bf16
    enc = enc_out.astype(jnp.bfloat16)
    save_inputs = []
    n_layers = len(params['layers'])
    for i, lp in enumerate(params['layers']):
        prev_i = None if previous is None else previous[:, i]
        final_gb = ((params['ln_f_g'], params['ln_f_b'])
                    if i == n_layers - 1 else None)    # fused final LayerNorm
        x, all_inp = decoder_layer(x, enc, src_pad, tgt_pad, lp,
                                   num_heads, prev_i, final_gb)
        save_inputs.append(all_inp)
    return x, jnp.stack(save_inputs, axis=1)


# ------------------------------ Initialization --------------------------------

def _xavier(key, out_dim, in_dim):
    a = math.sqrt(6.0 / (in_dim + out_dim))
    return jax.random.uniform(key, (out_dim, in_dim), jnp.float32, -a, a)


def init_layer_params(key, hidden, heads, ff_size):
    """Generate torch-layout (out,in) weights, then prepare them once:
    pre-transpose to (in,out), fold 1/sqrt(dim_per_head) into Q, pre-split and
    stack Q / KV weights along a leading axis, cast matmul weights to bf16."""
    ks = jax.random.split(key, 12)
    scale = 1.0 / math.sqrt(hidden // heads)
    bound = 1.0 / math.sqrt(hidden)

    def attn_weights(kq, kk, kv, ko, kb):
        wq = _xavier(kq, hidden, hidden).T * scale
        wk = _xavier(kk, hidden, hidden).T
        wv = _xavier(kv, hidden, hidden).T
        wo = _xavier(ko, hidden, hidden).T
        bo = jax.random.uniform(kb, (hidden,), jnp.float32, -bound, bound)
        return wq, wk, wv, wo, bo

    sq, sk, sv, so, sb = attn_weights(*ks[0:5])
    cq, ck, cv, co, cb = attn_weights(*ks[5:10])
    return {
        'w_q_self': jnp.stack([sq], axis=0).astype(jnp.bfloat16),
        'w_kv_self': jnp.stack([sk, sv], axis=0).astype(jnp.bfloat16),
        'w_o_self': so.astype(jnp.bfloat16),
        'b_o_self': sb,
        'w_q_src': jnp.stack([cq], axis=0).astype(jnp.bfloat16),
        'w_kv_src': jnp.stack([ck, cv], axis=0).astype(jnp.bfloat16),
        'w_o_src': co.astype(jnp.bfloat16),
        'b_o_src': cb,
        'ff_w1': _xavier(ks[10], ff_size, hidden).T.astype(jnp.bfloat16),
        'ff_w2': _xavier(ks[11], hidden, ff_size).T.astype(jnp.bfloat16),
        'ln0_g': jnp.ones((hidden,), jnp.float32),
        'ln0_b': jnp.zeros((hidden,), jnp.float32),
        'ln1_g': jnp.ones((hidden,), jnp.float32),
        'ln1_b': jnp.zeros((hidden,), jnp.float32),
        'ln2_g': jnp.ones((hidden,), jnp.float32),
        'ln2_b': jnp.zeros((hidden,), jnp.float32),
    }


def init_decoder_params(key, num_layers, hidden, heads, ff_size):
    keys = jax.random.split(key, num_layers)
    return {
        'layers': [init_layer_params(k, hidden, heads, ff_size) for k in keys],
        'ln_f_g': jnp.ones((hidden,), jnp.float32),
        'ln_f_b': jnp.zeros((hidden,), jnp.float32),
    }


# ----------------------------------- Main --------------------------------------

if __name__ == "__main__":
    B, L_tgt, L_src = 2, 8, 10
    hidden, heads, ff_size, num_layers = 32, 4, 64, 2

    key = jax.random.PRNGKey(0)
    k_par, k_x, k_enc = jax.random.split(key, 3)

    params = init_decoder_params(k_par, num_layers, hidden, heads, ff_size)
    x_emb = jax.random.normal(k_x, (B, L_tgt, hidden), jnp.float32)
    enc_out = jax.random.normal(k_enc, (B, L_src, hidden), jnp.float32)

    # Key-padding masks (nonzero == masked). Mark the last source position of
    # batch element 1 as padding to exercise the mask path.
    tgt_pad = jnp.zeros((B, L_tgt), jnp.float32)
    src_pad = jnp.zeros((B, L_src), jnp.float32).at[1, L_src - 1].set(1.0)

    out, save_inputs = decoder(x_emb, enc_out, src_pad, tgt_pad, params, heads)
    jax.block_until_ready(out)
    jax.block_until_ready(save_inputs)

    assert out.shape == (B, L_tgt, hidden)
    assert save_inputs.shape == (B, num_layers, L_tgt, hidden)
    assert bool(jnp.all(jnp.isfinite(out.astype(jnp.float32))))
    print("KERNEL_OK")
</pallas_src>

<mosaic_0001>
module attributes {stable_mosaic.version = 11 : i64} {
  func.func @_ln_proj_kernel(%arg0: i32, %arg1: i32, %arg2: memref<16x32xbf16, #tpu.memory_space<vmem>>, %arg3: memref<1x32xf32, #tpu.memory_space<vmem>>, %arg4: memref<1x32xf32, #tpu.memory_space<vmem>>, %arg5: memref<1x32x32xbf16, #tpu.memory_space<vmem>>, %arg6: memref<16x32xbf16, #tpu.memory_space<vmem>>, %arg7: memref<16x32xbf16, #tpu.memory_space<vmem>>) attributes {dimension_semantics = [#tpu.dimension_semantics<parallel>, #tpu.dimension_semantics<arbitrary>], iteration_bounds = array<i64: 1, 1>, scalar_prefetch = 0 : i64, scratch_operands = 1 : i64, tpu.core_type = #tpu.core_type<tc>, window_params = [{transform_indices = @transform_0, window_bounds = array<i64: 16, 32>}, {pipeline_mode = #tpu.pipeline_mode<synchronous>, transform_indices = @transform_1, window_bounds = array<i64: 1, 32>}, {pipeline_mode = #tpu.pipeline_mode<synchronous>, transform_indices = @transform_2, window_bounds = array<i64: 1, 32>}, {transform_indices = @transform_3, window_bounds = array<i64: 1, 32, 32>}, {transform_indices = @transform_4, window_bounds = array<i64: 16, 32>}]} {
    %c0_i32 = arith.constant 0 : i32
    %0 = arith.cmpi eq, %arg1, %c0_i32 : i32
    %1 = arith.extui %0 : i1 to i32
    %c0_i32_0 = arith.constant 0 : i32
    %2 = arith.cmpi ne, %1, %c0_i32_0 : i32
    scf.if %2 {
      %c0_7 = arith.constant 0 : index
      %c0_8 = arith.constant 0 : index
      %9 = vector.load %arg2[%c0_7, %c0_8] : memref<16x32xbf16, #tpu.memory_space<vmem>>, vector<16x32xbf16>
      %10 = arith.extf %9 : vector<16x32xbf16> to vector<16x32xf32>
      %cst_9 = arith.constant dense<0.000000e+00> : vector<16xf32>
      %11 = vector.multi_reduction <add>, %10, %cst_9 [1] : vector<16x32xf32> to vector<16xf32>
      %12 = vector.shape_cast %11 : vector<16xf32> to vector<16x1xf32>
      %cst_10 = arith.constant 3.200000e+01 : f32
      %13 = vector.broadcast %cst_10 : f32 to vector<16x1xf32>
      %14 = arith.divf %12, %13 : vector<16x1xf32>
      %15 = vector.broadcast %14 : vector<16x1xf32> to vector<16x32xf32>
      %16 = arith.subf %10, %15 : vector<16x32xf32>
      %17 = arith.mulf %16, %16 : vector<16x32xf32>
      %cst_11 = arith.constant dense<0.000000e+00> : vector<16xf32>
      %18 = vector.multi_reduction <add>, %17, %cst_11 [1] : vector<16x32xf32> to vector<16xf32>
      %19 = vector.shape_cast %18 : vector<16xf32> to vector<16x1xf32>
      %cst_12 = arith.constant 3.200000e+01 : f32
      %20 = vector.broadcast %cst_12 : f32 to vector<16x1xf32>
      %21 = arith.divf %19, %20 : vector<16x1xf32>
      %cst_13 = arith.constant 9.99999997E-7 : f32
      %22 = vector.broadcast %cst_13 : f32 to vector<16x1xf32>
      %23 = arith.addf %21, %22 : vector<16x1xf32>
      %24 = math.rsqrt %23 : vector<16x1xf32>
      %25 = vector.broadcast %24 : vector<16x1xf32> to vector<16x32xf32>
      %26 = arith.mulf %16, %25 : vector<16x32xf32>
      %c0_14 = arith.constant 0 : index
      %c0_15 = arith.constant 0 : index
      %27 = vector.load %arg3[%c0_14, %c0_15] : memref<1x32xf32, #tpu.memory_space<vmem>>, vector<1x32xf32>
      %28 = vector.broadcast %27 : vector<1x32xf32> to vector<16x32xf32>
      %29 = arith.mulf %26, %28 : vector<16x32xf32>
      %c0_16 = arith.constant 0 : index
      %c0_17 = arith.constant 0 : index
      %30 = vector.load %arg4[%c0_16, %c0_17] : memref<1x32xf32, #tpu.memory_space<vmem>>, vector<1x32xf32>
      %31 = vector.broadcast %30 : vector<1x32xf32> to vector<16x32xf32>
      %32 = arith.addf %29, %31 : vector<16x32xf32>
      %33 = arith.truncf %32 : vector<16x32xf32> to vector<16x32xbf16>
      %c0_18 = arith.constant 0 : index
      %c0_19 = arith.constant 0 : index
      %34 = vector.load %arg7[%c0_18, %c0_19] : memref<16x32xbf16, #tpu.memory_space<vmem>>, vector<16x32xbf16>
      tpu.vector_store %arg7[%c0_18, %c0_19], %33 {strides = array<i32>} : memref<16x32xbf16, #tpu.memory_space<vmem>>, vector<16x32xbf16>,
    } else {
    }
    %c0 = arith.constant 0 : index
    %c0_1 = arith.constant 0 : index
    %3 = vector.load %arg7[%c0, %c0_1] : memref<16x32xbf16, #tpu.memory_space<vmem>>, vector<16x32xbf16>
    %c0_2 = arith.constant 0 : index
    %c0_3 = arith.constant 0 : index
    %c0_4 = arith.constant 0 : index
    %4 = vector.load %arg5[%c0_2, %c0_3, %c0_4] : memref<1x32x32xbf16, #tpu.memory_space<vmem>>, vector<1x32x32xbf16>
    %5 = vector.shape_cast %4 : vector<1x32x32xbf16> to vector<32x32xbf16>
    %cst = arith.constant dense<0.000000e+00> : vector<16x32xf32>
    %6 = tpu.matmul %3, %5, %cst {dimension_numbers = #tpu.dot_dimension_numbers<[1], [0], [0], [1], [0, 0, 1, 1], [], []>} : vector<16x32xbf16>, vector<32x32xbf16>, vector<16x32xf32> -> vector<16x32xf32>
    %7 = arith.truncf %6 : vector<16x32xf32> to vector<16x32xbf16>
    %c0_5 = arith.constant 0 : index
    %c0_6 = arith.constant 0 : index
    %8 = vector.load %arg6[%c0_5, %c0_6] : memref<16x32xbf16, #tpu.memory_space<vmem>>, vector<16x32xbf16>
    tpu.vector_store %arg6[%c0_5, %c0_6], %7 {strides = array<i32>} : memref<16x32xbf16, #tpu.memory_space<vmem>>, vector<16x32xbf16>,
    return
  }
  func.func @transform_0(%arg0: i32, %arg1: i32) -> (i32, i32) {
    %c0_i32 = arith.constant 0 : i32
    %c0_i32_0 = arith.constant 0 : i32
    return %arg0, %c0_i32 : i32, i32
  }
  func.func @transform_1(%arg0: i32, %arg1: i32) -> (i32, i32) {
    %c0_i32 = arith.constant 0 : i32
    %c0_i32_0 = arith.constant 0 : i32
    %c0_i32_1 = arith.constant 0 : i32
    return %c0_i32, %c0_i32_0 : i32, i32
  }
  func.func @transform_2(%arg0: i32, %arg1: i32) -> (i32, i32) {
    %c0_i32 = arith.constant 0 : i32
    %c0_i32_0 = arith.constant 0 : i32
    %c0_i32_1 = arith.constant 0 : i32
    return %c0_i32, %c0_i32_0 : i32, i32
  }
  func.func @transform_3(%arg0: i32, %arg1: i32) -> (i32, i32, i32) {
    %c0_i32 = arith.constant 0 : i32
    %c0_i32_0 = arith.constant 0 : i32
    %c0_i32_1 = arith.constant 0 : i32
    return %c0_i32, %c0_i32_0, %arg1 : i32, i32, i32
  }
  func.func @transform_4(%arg0: i32, %arg1: i32) -> (i32, i32) {
    %c0_i32 = arith.constant 0 : i32
    return %arg0, %arg1 : i32, i32
  }
}

</mosaic_0001>

<llo_original>
// kernel: tpu_custom_call.1
$region0: #{tpu_custom_call.1}
  #allocation0 [shape = 'u32[]', space=smem, size = 0x4, offset = 0x4, fixed_abs, tag = 'smem constant byte address 0x4 - core index']
  #allocation1 [shape = 'u32[72,128]{1,0:T(1,128)}', space=vmem, size = 0x9000, scoped, tag = 'internal scratch']
  #allocation2 [shape = 'bf16[16,32]{1,0:T(8,128)(2,1)}', space=vmem, size = 0x1000, scoped, tag = 'scratch operand']
  %s0 = inlined_call_operand.hbm [shape: bf16[16,32], index: 0, kind: input, shape index: {}]
  %s1 = inlined_call_operand.hbm [shape: f32[1,32], index: 1, kind: input, shape index: {}]
  %s2 = inlined_call_operand.vmem [shape: f32[1,32], index: 2, kind: input, shape index: {}]
  %s3 = inlined_call_operand.hbm [shape: bf16[1,32,32], index: 3, kind: input, shape index: {}]
  %s4 = inlined_call_operand.hbm [shape: bf16[16,32], index: 4, kind: output, shape index: {}]
  %s5 = sld [smem:[#allocation0]]
  $region42: #{tpu_custom_call.1} parent=0
    _
  %s7 = ssub.s32 1, %s5
  %s8 = scalar_select 0, %s7, %s5
  $region1: #{tpu_custom_call.1} parent=0
    #allocation3 [shape = 'u8[4096]{0}', space=vmem, size = 0x1000, scoped, tag = 'input window, operand 0, single buffered']
    #allocation4 [shape = 's32[1]{0}', space=sflag, size = 0x4, scoped, tag = 'scoped memory for tpu_custom_call.1']
    #allocation5 [shape = 's32[1]{0}', space=sflag, size = 0x4, scoped, tag = 'scoped memory for tpu_custom_call.1']
    #allocation6 [shape = 'u8[512]{0}', space=vmem, size = 0x400, scoped, tag = 'input window, operand 1, single buffered']
    #allocation7 [shape = 's32[1]{0}', space=sflag, size = 0x4, scoped, tag = 'scoped memory for tpu_custom_call.1']
    #allocation8 [shape = 'u8[8192]{0}', space=vmem, size = 0x2000, scoped, tag = 'input window, operand 3, single buffered']
    #allocation9 [shape = 'u8[4096]{0}', space=vmem, size = 0x1000, scoped, tag = 'output window, operand 0, single buffered']
    %9 = vsyncpa [#allocation4], 0
    %10 = vsyncpa [#allocation7], 0
    %11 = vsyncpa [#allocation5], 0
    // Predicated region
    $region2: #{tpu_custom_call.1} parent=1 // pred_check
      _
    $region3: #{tpu_custom_call.1} parent=1 // pred_check_branch
      %13 = sbr.rel (0) target = $region5
    $region4: #{tpu_custom_call.1} parent=1 // pred_region
      %15 = vsyncadd [#allocation4], 0
      %s16 = sshll.u32 %s0, 4
      %s17 = int_to_ptr.hbm [resolvable:$true] %s16
      %s18 = sshll.u32 [#allocation3], 4
      %s19 = int_to_ptr.vmem [resolvable:$true] %s18
      %24 = dma.hbm_to_vmem [thread:$0]  %s17, 128, %s19, [#allocation4], 64, 64, 4
    $region5: #{tpu_custom_call.1} parent=1 // pred_fallthru
      _
    // Predicated region
    $region6: #{tpu_custom_call.1} parent=1 // pred_check
      _
    $region7: #{tpu_custom_call.1} parent=1 // pred_check_branch
      %26 = sbr.rel (0) target = $region9
    $region8: #{tpu_custom_call.1} parent=1 // pred_region
      %28 = vsyncadd [#allocation7], 0
      %s30 = sshll.u32 %s1, 4
      %s31 = int_to_ptr.hbm [resolvable:$true] %s30
      %s32 = sshll.u32 [#allocation6], 4
      %s33 = int_to_ptr.vmem [resolvable:$true] %s32
      %35 = dma.hbm_to_vmem [thread:$0]  %s31, 16, %s33, [#allocation7]
    $region9: #{tpu_custom_call.1} parent=1 // pred_fallthru
      _
    // Predicated region
    $region10: #{tpu_custom_call.1} parent=1 // pred_check
      _
    $region11: #{tpu_custom_call.1} parent=1 // pred_check_branch
      %37 = sbr.rel (0) target = $region13
    $region12: #{tpu_custom_call.1} parent=1 // pred_region
      _
    $region13: #{tpu_custom_call.1} parent=1 // pred_fallthru
      _
    // Predicated region
    $region14: #{tpu_custom_call.1} parent=1 // pred_check
      _
    $region15: #{tpu_custom_call.1} parent=1 // pred_check_branch
      %39 = sbr.rel (0) target = $region17
    $region16: #{tpu_custom_call.1} parent=1 // pred_region
      %41 = vsyncadd [#allocation7], 0
      %s42 = sshll.u32 %s3, 4
      %s43 = int_to_ptr.hbm [resolvable:$true] %s42
      %s44 = sshll.u32 [#allocation8], 4
      %s45 = int_to_ptr.vmem [resolvable:$true] %s44
      %50 = dma.hbm_to_vmem [thread:$0]  %s43, 256, %s45, [#allocation7], 64, 64, 4
    $region17: #{tpu_custom_call.1} parent=1 // pred_fallthru
      _
    // Predicated region
    $region18: #{tpu_custom_call.1} parent=1 // pred_check
      _
    $region19: #{tpu_custom_call.1} parent=1 // pred_check_branch
      %52 = sbr.rel (0) target = $region21
    $region20: #{tpu_custom_call.1} parent=1 // pred_region
      %54 = dma.done [#allocation4], 128
    $region21: #{tpu_custom_call.1} parent=1 // pred_fallthru
      _
    // Predicated region
    $region22: #{tpu_custom_call.1} parent=1 // pred_check
      _
    $region23: #{tpu_custom_call.1} parent=1 // pred_check_branch
      %56 = sbr.rel (0) target = $region25
    $region24: #{tpu_custom_call.1} parent=1 // pred_region
      %58 = dma.done [#allocation7], 16
    $region25: #{tpu_custom_call.1} parent=1 // pred_fallthru
      _
    // Predicated region
    $region26: #{tpu_custom_call.1} parent=1 // pred_check
      _
    $region27: #{tpu_custom_call.1} parent=1 // pred_check_branch
      %60 = sbr.rel (0) target = $region29
    $region28: #{tpu_custom_call.1} parent=1 // pred_region
      %62 = dma.done [#allocation7], 256
    $region29: #{tpu_custom_call.1} parent=1 // pred_fallthru
      _
    %p64 = scmp.eq.s32.totalorder 0, 0
    // Predicated region
    $region30: #{tpu_custom_call.1} parent=1 // pred_check
      %p65 = pneg %p64
    $region31: #{tpu_custom_call.1} parent=1 // pred_check_branch
      %67 = sbr.rel (%p65) target = $region33
    $region32: #{tpu_custom_call.1} parent=1 // pred_region
      %v68 = vld [vmem:[#allocation3] sm:$0xf]
      %v69 = vld [vmem:[#allocation3 + $0x4] sm:$0xf]
      %v70 = vunpack.c.l.bf16 %v68
      %v71 = vunpack.c.l.bf16 %v69
      %vm72 = vcmask 261120
      %v73 = vsel %vm72, %v70, 0.0
      %74 = vadd.xlane.f32.xlu0 %v73
      %v75 = vpop.xlane.xlu0 %74
      %v76 = vsel %vm72, %v71, 0.0
      %77 = vadd.xlane.f32.xlu0 %v76
      %v78 = vpop.xlane.xlu0 %77
      %v79 = vrcp.pop 32.0
      %v80 = vmul.f32 32.0, %v79
      %v81 = vsub.f32 1.0, %v80
      %v82 = vmul.f32 %v79, %v81
      %v83 = vadd.f32 %v79, %v82
      %vm84 = vweird.f32 %v79
      %v85 = vsel %vm84, %v79, %v83
      %v86 = vmul.f32 %v75, %v85
      %v87 = vmul.f32 %v78, %v85
      %v88 = vsub.f32 %v70, %v86
      %v89 = vsub.f32 %v71, %v87
      %v90 = vmul.f32 %v88, %v88
      %v91 = vmul.f32 %v89, %v89
      %v92 = vsel %vm72, %v90, 0.0
      %93 = vadd.xlane.f32.xlu0 %v92
      %v94 = vpop.xlane.xlu0 %93
      %v95 = vsel %vm72, %v91, 0.0
      %96 = vadd.xlane.f32.xlu0 %v95
      %v97 = vpop.xlane.xlu0 %96
      %v98 = vmul.f32 %v94, %v85
      %v99 = vmul.f32 %v97, %v85
      %v100 = vadd.f32 %v98, 1e-06
      %v101 = vadd.f32 %v99, 1e-06
      %v102 = vrsqrt.pop %v100
      %v103 = vmul.f32 %v102, %v100
      %v104 = vmul.f32 %v103, %v102
      %v105 = vmul.f32 0.5, %v104
      %v106 = vsub.f32 1.5, %v105
      %v107 = vmul.f32 %v102, %v106
      %vm108 = vweird.f32 %v100
      %vm109 = vweird.f32 %v102
      %vm110 = vmor %vm108, %vm109
      %v111 = vsel %vm110, %v102, %v107
      %v112 = vrsqrt.pop %v101
      %v113 = vmul.f32 %v112, %v101
      %v114 = vmul.f32 %v113, %v112
      %v115 = vmul.f32 0.5, %v114
      %v116 = vsub.f32 1.5, %v115
      %v117 = vmul.f32 %v112, %v116
      %vm118 = vweird.f32 %v101
      %vm119 = vweird.f32 %v112
      %vm120 = vmor %vm118, %vm119
      %v121 = vsel %vm120, %v112, %v117
      %v122 = vmul.f32 %v88, %v111
      %v123 = vmul.f32 %v89, %v121
      %v124 = vld [vmem:[#allocation6] sm:$0x1]
      %v126 = vperm.slane %v124, 0
      %v128 = vmul.f32 %v122, %v126
      %v129 = vmul.f32 %v123, %v126
      %v130 = vld [vmem:[%s2] sm:$0x1]
      %v132 = vperm.slane %v130, 0
      %v134 = vadd.f32 %v128, %v132
      %v135 = vadd.f32 %v129, %v132
      %v136 = vpack.c.bf16 %v134, %v134
      %v137 = vpack.c.bf16 %v135, %v135
      %vm138 = vcmask 257024
      %139 = vst.msk [vmem:[#allocation2] sm:$0xf] %vm138, %v136
      %140 = vst.msk [vmem:[#allocation2 + $0x4] sm:$0xf] %vm138, %v137
    $region33: #{tpu_custom_call.1} parent=1 // pred_fallthru
      _
    %v141 = vld [vmem:[#allocation2] sm:$0xf]
    %v142 = vld [vmem:[#allocation2 + $0x4] sm:$0xf]
    %v143 = vld [vmem:[#allocation8] sm:$0xf]
    %v144 = vld [vmem:[#allocation8 + $0x4] sm:$0xf]
    %v145 = vld [vmem:[#allocation8 + $0x8] sm:$0xf]
    %v146 = vld [vmem:[#allocation8 + $0xc] sm:$0xf]
    %v149 = vunpack.c.l.b16 %v141
    %v150 = vunpack.c.l.b16 %v142
    %v151 = vpack.c.b16 %v150, %v149
    %v156 = vunpack.c.l.b16 %v143
    %v157 = vunpack.c.l.b16 %v144
    %v158 = vunpack.c.l.b16 %v145
    %v159 = vunpack.c.l.b16 %v146
    %v160 = vpack.c.b16 %v157, %v156
    %v161 = vpack.c.b16 %v159, %v158
    %vm164 = vcmask 261120
    %v166 = vsel %vm164, %v151, 0
    %168 = vmatpush.bf16.msra.mxu0 0
    %169 = vmatpush.bf16.msra.mxu0 0
    %170 = vmatpush.bf16.msra.mxu0 0
    %171 = vmatpush.bf16.msra.mxu0 0
    %172 = vmatpush.bf16.msra.mxu0 0
    %173 = vmatpush.bf16.msra.mxu0 0
    %174 = vmatpush.bf16.msra.mxu0 %v161
    %175 = vmatpush.bf16.msra.mxu0 %v160
    %176 = vmatmul.bf16.gmra.mxu0 %v166
    %v177 = vpop.f32.mrf.mxu0
    %v178 = vadd.f32 0.0, %v177
    %v179 = vpop.f32.mrf.mxu0
    %v180 = vadd.f32 0.0, %v179
    %181 = vdwg.mxu0
    %v182 = vpack.c.bf16 %v178, %v178
    %v183 = vpack.c.bf16 %v180, %v180
    %vm184 = vcmask 257024
    %185 = vst.msk [vmem:[#allocation9] sm:$0xf] %vm184, %v182
    %186 = vst.msk [vmem:[#allocation9 + $0x4] sm:$0xf] %vm184, %v183
    // Predicated region
    $region34: #{tpu_custom_call.1} parent=1 // pred_check
      _
    $region35: #{tpu_custom_call.1} parent=1 // pred_check_branch
      %188 = sbr.rel (0) target = $region37
    $region36: #{tpu_custom_call.1} parent=1 // pred_region
      %190 = vsyncadd [#allocation5], 0
      %s191 = sshll.u32 [#allocation9], 4
      %s192 = int_to_ptr.vmem [resolvable:$true] %s191
      %s193 = sshll.u32 %s4, 4
      %s194 = int_to_ptr.hbm [resolvable:$true] %s193
      %199 = dma.vmem_to_hbm [thread:$0]  %s192, 128, %s194, [#allocation5], 64, 64, 4
    $region37: #{tpu_custom_call.1} parent=1 // pred_fallthru
      _
    // Predicated region
    $region38: #{tpu_custom_call.1} parent=1 // pred_check
      _
    $region39: #{tpu_custom_call.1} parent=1 // pred_check_branch
      %201 = sbr.rel (0) target = $region41
    $region40: #{tpu_custom_call.1} parent=1 // pred_region
      %203 = dma.done [#allocation5], 128
    $region41: #{tpu_custom_call.1} parent=1 // pred_fallthru
      _
    %204 = vsyncpa [#allocation4], 1
    %205 = vsyncpa [#allocation7], 1
    %206 = vsyncpa [#allocation5], 1

</llo_original>
